<compile_context>
chip_gen: v7x
topology: tpu7x:2x2x1
jax: 0.10.0
libtpu: 0.0.40
codegen_flags: <defaults>
</compile_context>

<pallas_src>
import functools
import math

import jax
import jax.numpy as jnp
from jax.experimental import pallas as pl
from jax.experimental.pallas import tpu as pltpu


_ACT_DTYPE = jnp.bfloat16          # inter-kernel activation dtype


def _tpu_budget():
    """Row-tile size / scoped-VMEM limit per TPU generation.

    v5e / v6e have 128 MiB physical VMEM -> 512-row tiles (~85% of the HBM
    roofline on mem-bound linears) and a raised scoped limit.  v7x (64 MiB)
    and unknown parts stay at 256 rows / the default 32 MiB limit.
    """
    tm, vmem = 256, 32 * 1024 * 1024
    try:
        info = pltpu.get_tpu_info()
        cap = getattr(info, "vmem_capacity_bytes", None)
        if cap is not None and cap >= 96 * 1024 * 1024:
            tm, vmem = 512, 64 * 1024 * 1024
    except Exception:
        pass
    return tm, vmem


_ROW_TILE, _VMEM_LIMIT = _tpu_budget()


def _pick_tm(rows):
    """Full block for small inputs, _ROW_TILE-row (8-multiple) tiles otherwise."""
    return rows if rows <= _ROW_TILE else _ROW_TILE


def _row_params():
    # TODO(synk): pad R so cdiv(R, tm) is even on v7x for balanced megacore
    # sharding; skipped here (toy shapes fit in a single block anyway).
    return pltpu.CompilerParams(dimension_semantics=("parallel",),
                                vmem_limit_bytes=_VMEM_LIMIT)


# ----------------------------------------------------------------------------
# Pallas kernels
# ----------------------------------------------------------------------------

def _ln_kernel(x_ref, g_ref, b_ref, o_ref, *, eps):
    """LayerNorm over the last (hidden) axis — no residual input."""
    y = x_ref[...].astype(jnp.float32)
    mu = jnp.mean(y, axis=-1, keepdims=True)
    var = jnp.mean(jnp.square(y - mu), axis=-1, keepdims=True)
    o_ref[...] = ((y - mu) * jax.lax.rsqrt(var + eps) * g_ref[...]
                  + b_ref[...]).astype(o_ref.dtype)


def layernorm(x, gamma, beta, eps=1e-12, out_dtype=_ACT_DTYPE):
    R, H = x.shape
    tm = _pick_tm(R)
    return pl.pallas_call(
        functools.partial(_ln_kernel, eps=eps),
        grid=(pl.cdiv(R, tm),),
        in_specs=[pl.BlockSpec((tm, H), lambda i: (i, 0)),
                  pl.BlockSpec((1, H), lambda i: (0, 0)),
                  pl.BlockSpec((1, H), lambda i: (0, 0))],
        out_specs=pl.BlockSpec((tm, H), lambda i: (i, 0)),
        out_shape=jax.ShapeDtypeStruct((R, H), out_dtype),
        compiler_params=_row_params(),
    )(x, gamma.reshape(1, H), beta.reshape(1, H))


def _linear_kernel(x_ref, w_ref, b_ref, o_ref, *, act):
    """o = act(x @ w + b); bf16 MXU operands, f32 accumulation/epilogue."""
    x = x_ref[...].astype(jnp.bfloat16)
    y = jnp.dot(x, w_ref[...], preferred_element_type=jnp.float32) + b_ref[...]
    if act == "gelu":
        y = jax.nn.gelu(y)
    elif act == "tanh":
        y = jnp.tanh(y)
    o_ref[...] = y.astype(o_ref.dtype)


def linear(x, w, b, act=None, out_dtype=_ACT_DTYPE):
    # x: (R, K), w: (K, N) bf16 (pre-cast at init), b: (N,) f32 -> (R, N)
    R, K = x.shape
    N = w.shape[1]
    tm = _pick_tm(R)
    # TODO(synk): on v7x consider pipeline_mode=pl.Buffered on the constant
    # weight spec to avoid double-buffering the resident (K, N) weight.
    return pl.pallas_call(
        functools.partial(_linear_kernel, act=act),
        grid=(pl.cdiv(R, tm),),
        in_specs=[pl.BlockSpec((tm, K), lambda i: (i, 0)),
                  pl.BlockSpec((K, N), lambda i: (0, 0)),
                  pl.BlockSpec((1, N), lambda i: (0, 0))],
        out_specs=pl.BlockSpec((tm, N), lambda i: (i, 0)),
        out_shape=jax.ShapeDtypeStruct((R, N), out_dtype),
        compiler_params=_row_params(),
    )(x, w, b.reshape(1, N))


def _linear_res_ln_kernel(x_ref, w_ref, b_ref, r_ref, g_ref, bt_ref, o_ref, *, eps):
    """o = LayerNorm(residual + x @ w + b) — matmul, residual add and LN fused."""
    x = x_ref[...].astype(jnp.bfloat16)
    y = jnp.dot(x, w_ref[...], preferred_element_type=jnp.float32) + b_ref[...]
    y = y + r_ref[...].astype(jnp.float32)
    mu = jnp.mean(y, axis=-1, keepdims=True)
    var = jnp.mean(jnp.square(y - mu), axis=-1, keepdims=True)
    o_ref[...] = ((y - mu) * jax.lax.rsqrt(var + eps) * g_ref[...]
                  + bt_ref[...]).astype(o_ref.dtype)


def linear_res_ln(x, w, b, residual, gamma, beta, eps=1e-12, out_dtype=_ACT_DTYPE):
    R, K = x.shape
    H = w.shape[1]
    tm = _pick_tm(R)
    return pl.pallas_call(
        functools.partial(_linear_res_ln_kernel, eps=eps),
        grid=(pl.cdiv(R, tm),),
        in_specs=[pl.BlockSpec((tm, K), lambda i: (i, 0)),
                  pl.BlockSpec((K, H), lambda i: (0, 0)),
                  pl.BlockSpec((1, H), lambda i: (0, 0)),
                  pl.BlockSpec((tm, H), lambda i: (i, 0)),
                  pl.BlockSpec((1, H), lambda i: (0, 0)),
                  pl.BlockSpec((1, H), lambda i: (0, 0))],
        out_specs=pl.BlockSpec((tm, H), lambda i: (i, 0)),
        out_shape=jax.ShapeDtypeStruct((R, H), out_dtype),
        compiler_params=_row_params(),
    )(x, w, b.reshape(1, H), residual, gamma.reshape(1, H), beta.reshape(1, H))


def _attn_kernel(qkv_ref, m_ref, o_ref, *, nH, scale):
    """Masked attention, all heads of one batch element per grid step.

    qkv_ref block: (1, S, 3*nH, dh) — heads read via static ref slices (no
    host transposes); output is a lane-dense (1, S, H) block so the HBM
    writeback is unmasked full-width stores."""
    m = m_ref[0]                                   # (1, S) f32, 1 = keep
    neg = (m - 1.0) * 1e9                          # additive key mask
    outs = []
    for h in range(nH):                            # static unroll over heads
        q = qkv_ref[0, :, 0 * nH + h]              # (S, dh) bf16
        k = qkv_ref[0, :, 1 * nH + h]
        v = qkv_ref[0, :, 2 * nH + h]
        s = jnp.dot(q, k.T, preferred_element_type=jnp.float32) * scale + neg
        s_max = jnp.max(s, axis=-1, keepdims=True)
        e = jnp.exp(s - s_max)
        p = e * pl.reciprocal(jnp.sum(e, axis=-1, keepdims=True), approx=True)
        outs.append(jnp.dot(p.astype(v.dtype), v,
                            preferred_element_type=jnp.float32))
    o_ref[0] = jnp.concatenate(outs, axis=-1).astype(o_ref.dtype)


def attention(qkv4, mask, *, num_heads):
    # qkv4: (B, S, 3*nH, dh) bf16 (free reshape of the fused QKV projection)
    # mask: (B, S) float (1 = keep, 0 = pad)
    # TODO(synk): for S >= ~1k, tile the key axis with an online-softmax
    # (flash) accumulator instead of full-S scores.
    B, S, _, dh = qkv4.shape
    nH = num_heads
    H = nH * dh
    m3 = mask.reshape(B, 1, S)
    return pl.pallas_call(
        functools.partial(_attn_kernel, nH=nH, scale=1.0 / math.sqrt(dh)),
        grid=(B,),
        in_specs=[pl.BlockSpec((1, S, 3 * nH, dh), lambda b: (b, 0, 0, 0)),
                  pl.BlockSpec((1, 1, S), lambda b: (b, 0, 0))],
        out_specs=pl.BlockSpec((1, S, H), lambda b: (b, 0, 0)),
        out_shape=jax.ShapeDtypeStruct((B, S, H), _ACT_DTYPE),
        compiler_params=pltpu.CompilerParams(dimension_semantics=("parallel",)),
    )(qkv4, m3)


def _gru_step_kernel(gi_ref, whh_ref, bhh_ref, o_ref, h_ref, *, hid):
    """One GRU time step (PyTorch gate order [r, z, n]), both directions share
    the kernel via the grid's direction axis.

    CORRECTNESS NOTE: the hidden-state scratch h_ref relies on the grid
    iterating direction-major with time innermost ("arbitrary"), so each
    direction's steps run consecutively and h is reset at t == 0.  Under
    megacore the "parallel" direction axis gives each core its own scratch,
    which is also correct.  Do not reorder the grid axes or mark time
    parallel."""
    @pl.when(pl.program_id(1) == 0)
    def _():
        h_ref[...] = jnp.zeros_like(h_ref)

    h = h_ref[...]                                                  # (N, hid) f32
    # single fused (N, hid) @ (hid, 3*hid) dot on the serial critical path
    gh = jnp.dot(h.astype(jnp.bfloat16), whh_ref[0],
                 preferred_element_type=jnp.float32) + bhh_ref[0]   # (N, 3*hid)
    gi = gi_ref[0, 0].astype(jnp.float32)                           # (N, 3*hid)
    r = jax.nn.sigmoid(gi[:, :hid] + gh[:, :hid])
    z = jax.nn.sigmoid(gi[:, hid:2 * hid] + gh[:, hid:2 * hid])
    n = jnp.tanh(gi[:, 2 * hid:] + r * gh[:, 2 * hid:])
    h_new = (1.0 - z) * n + z * h
    h_ref[...] = h_new
    o_ref[0, 0] = h_new.astype(o_ref.dtype)


def bigru(x_flat, L, N, params, hid):
    """Bidirectional GRU over the leading axis of the (L, N, Hin) tensor.

    x_flat: (L*N, Hin) row-major (L outer).  Faithful to the PyTorch code's
    batch_first=False quirk: L is the encoder *batch* axis, N the seq axis."""
    # hoisted input projection for BOTH directions in one fused matmul
    gi = linear(x_flat, params["gru_w_in"], params["gru_b_in"])     # (L*N, 6*hid) bf16
    # (L, N, 6h) -> (L, N, 2, 3h) is a free reshape; one transpose brings the
    # direction axis to the front.  No host-side reverse, no per-gate stacks.
    gi = gi.reshape(L, N, 2, 3 * hid).transpose(2, 0, 1, 3)         # (2, L, N, 3h)

    def tmap(d, t):
        # time block: t for the forward direction, L-1-t for the backward one;
        # used for both the input gates and the output (which un-reverses it).
        return (d, t + d * (L - 1 - 2 * t), 0, 0)

    out = pl.pallas_call(
        functools.partial(_gru_step_kernel, hid=hid),
        grid=(2, L),
        in_specs=[pl.BlockSpec((1, 1, N, 3 * hid), tmap),
                  pl.BlockSpec((1, hid, 3 * hid), lambda d, t: (d, 0, 0)),
                  pl.BlockSpec((1, 1, 3 * hid), lambda d, t: (d, 0, 0))],
        out_specs=pl.BlockSpec((1, 1, N, hid), tmap),
        out_shape=jax.ShapeDtypeStruct((2, L, N, hid), jnp.float32),
        scratch_shapes=[pltpu.VMEM((N, hid), jnp.float32)],
        compiler_params=pltpu.CompilerParams(
            dimension_semantics=("parallel", "arbitrary")),
    )(gi, params["gru_whh"], params["gru_bhh"])

    # out[1] is already in original-position order (output index_map reverses)
    return jnp.concatenate([out[0], out[1]], axis=-1)               # (L, N, 2*hid)


def _exp_head_kernel(x_ref, w_ref, b_ref, m_ref, o_ref):
    """exp_out = sigmoid(<gru_out, w> + b) * attention_mask — VPU reduction."""
    x = x_ref[...].astype(jnp.float32)                              # (B, S, 2*hid)
    logits = jnp.sum(x * w_ref[...], axis=-1) + b_ref[...]          # (B, S)
    o_ref[...] = (jax.nn.sigmoid(logits) * m_ref[...]).astype(o_ref.dtype)


def exp_head(gru_out, w, b, mask):
    B, S, H2 = gru_out.shape
    vmem = pl.BlockSpec(memory_space=pltpu.MemorySpace.VMEM)
    return pl.pallas_call(
        _exp_head_kernel,
        in_specs=[vmem, vmem, vmem, vmem],
        out_specs=vmem,
        out_shape=jax.ShapeDtypeStruct((B, S), jnp.float32),
    )(gru_out, w.reshape(1, 1, H2), b.reshape(1, 1), mask)


# ----------------------------------------------------------------------------
# Parameters (deterministic synthetic init; stand-in for the HF checkpoint).
# Weights are packed/fused and cast to bf16 ONCE here.
# ----------------------------------------------------------------------------

def init_params(key, vocab, max_pos, H, inter, exp_hid, n_cls):
    ks = jax.random.split(key, 16)
    std = 0.02
    bf = jnp.bfloat16
    nrm = lambda k, shape: jax.random.normal(k, shape, jnp.float32) * std
    p = {}
    p["word_emb"] = nrm(ks[0], (vocab, H))
    p["pos_emb"] = nrm(ks[1], (max_pos, H))
    p["emb_ln_g"], p["emb_ln_b"] = jnp.ones((H,)), jnp.zeros((H,))
    wq, wk, wv = nrm(ks[2], (H, H)), nrm(ks[3], (H, H)), nrm(ks[4], (H, H))
    p["wqkv"] = jnp.concatenate([wq, wk, wv], axis=1).astype(bf)     # (H, 3H)
    p["bqkv"] = jnp.zeros((3 * H,))
    p["wo"], p["bo"] = nrm(ks[5], (H, H)).astype(bf), jnp.zeros((H,))
    p["attn_ln_g"], p["attn_ln_b"] = jnp.ones((H,)), jnp.zeros((H,))
    p["w1"], p["b1"] = nrm(ks[6], (H, inter)).astype(bf), jnp.zeros((inter,))
    p["w2"], p["b2"] = nrm(ks[7], (inter, H)).astype(bf), jnp.zeros((H,))
    p["ffn_ln_g"], p["ffn_ln_b"] = jnp.ones((H,)), jnp.zeros((H,))
    p["wp"], p["bp"] = nrm(ks[8], (H, H)).astype(bf), jnp.zeros((H,))
    # bidirectional GRU, PyTorch layout (3*hid, in) per direction, gates [r,z,n]
    wih_f, whh_f = nrm(ks[9], (3 * exp_hid, H)), nrm(ks[10], (3 * exp_hid, exp_hid))
    wih_b, whh_b = nrm(ks[11], (3 * exp_hid, H)), nrm(ks[12], (3 * exp_hid, exp_hid))
    # packed: input proj (H, 6*hid) [fwd | bwd], hidden proj (2, hid, 3*hid)
    p["gru_w_in"] = jnp.concatenate([wih_f.T, wih_b.T], axis=1).astype(bf)
    p["gru_b_in"] = jnp.zeros((6 * exp_hid,))
    p["gru_whh"] = jnp.stack([whh_f.T, whh_b.T], axis=0).astype(bf)
    p["gru_bhh"] = jnp.zeros((2, 1, 3 * exp_hid))
    p["w_exp"], p["b_exp"] = nrm(ks[13], (2 * exp_hid,)), jnp.zeros(())
    p["w_cls"], p["b_cls"] = nrm(ks[14], (H, n_cls)).astype(bf), jnp.zeros((n_cls,))
    return p


# ----------------------------------------------------------------------------
# MTLModel.forward
# ----------------------------------------------------------------------------

def mtl_forward(params, input_ids, attention_mask, *, num_heads=4):
    B, S = input_ids.shape
    H = params["word_emb"].shape[1]
    nH, dh = num_heads, H // num_heads
    mask_f = attention_mask.astype(jnp.float32)

    # ---- base model (synthetic 1-layer BERT-style encoder) ----
    emb = jnp.take(params["word_emb"], input_ids, axis=0) + params["pos_emb"][None, :S, :]
    x = layernorm(emb.reshape(B * S, H), params["emb_ln_g"], params["emb_ln_b"])

    # Fused QKV projection: one matmul, x read from HBM once; free reshape to
    # (B, S, 3*nH, dh) -> no host-side head split / transposes.
    qkv = linear(x, params["wqkv"], params["bqkv"])                  # (B*S, 3H) bf16
    ctx = attention(qkv.reshape(B, S, 3 * nH, dh), mask_f, num_heads=nH)
    ctx = ctx.reshape(B * S, H)                                      # free reshape

    # Fused: output projection + residual + attention LayerNorm
    x = linear_res_ln(ctx, params["wo"], params["bo"], x,
                      params["attn_ln_g"], params["attn_ln_b"])

    # FFN: up-projection + GELU, then fused down-projection + residual + LN
    h = linear(x, params["w1"], params["b1"], act="gelu")
    x = linear_res_ln(h, params["w2"], params["b2"], x,
                      params["ffn_ln_g"], params["ffn_ln_b"])

    seq_out = x.reshape(B, S, H)                                     # outputs[0]
    pooled = linear(seq_out[:, 0, :], params["wp"], params["bp"], act="tanh")

    # ---- exp head: bidirectional GRU + Linear + Sigmoid ----
    # NOTE: nn.GRU default batch_first=False, so the original PyTorch code
    # recurs over the *batch* axis of the (B, S, H) BERT output; reproduced.
    exp_hid = params["gru_whh"].shape[1]
    gru_out = bigru(x, B, S, params, exp_hid)                        # (B, S, 2*exp_hid)
    exp_out = exp_head(gru_out, params["w_exp"], params["b_exp"], mask_f)  # (B, S)

    # ---- cls head: Dropout(0.1) + Linear ----
    # Dropout is identity (inference semantics; no RNG-dependent masking).
    cls_out = linear(pooled, params["w_cls"], params["b_cls"],
                     out_dtype=jnp.float32)                          # (B, num_classes)
    return cls_out, exp_out


# ----------------------------------------------------------------------------

if __name__ == "__main__":
    key = jax.random.PRNGKey(0)
    B, S = 2, 8
    H, inter = 32, 64
    vocab, max_pos = 64, 16
    exp_hid, n_cls = 16, 6

    pkey, ikey = jax.random.split(key)
    params = init_params(pkey, vocab, max_pos, H, inter, exp_hid, n_cls)

    input_ids = jax.random.randint(ikey, (B, S), 0, vocab, dtype=jnp.int32)
    attention_mask = jnp.concatenate(
        [jnp.ones((B, 6), jnp.int32), jnp.zeros((B, 2), jnp.int32)], axis=1)

    cls_out, exp_out = mtl_forward(params, input_ids, attention_mask)
    jax.block_until_ready((cls_out, exp_out))

    assert cls_out.shape == (B, n_cls), cls_out.shape
    assert exp_out.shape == (B, S), exp_out.shape
    assert bool(jnp.all(jnp.isfinite(cls_out))) and bool(jnp.all(jnp.isfinite(exp_out)))
    print("KERNEL_OK")
</pallas_src>

<mosaic_0001>
module attributes {stable_mosaic.version = 11 : i64} {
  func.func @_ln_kernel(%arg0: i32, %arg1: memref<16x32xf32, #tpu.memory_space<vmem>>, %arg2: memref<1x32xf32, #tpu.memory_space<vmem>>, %arg3: memref<1x32xf32, #tpu.memory_space<vmem>>, %arg4: memref<16x32xbf16, #tpu.memory_space<vmem>>) attributes {dimension_semantics = [#tpu.dimension_semantics<parallel>], iteration_bounds = array<i64: 1>, scalar_prefetch = 0 : i64, scratch_operands = 0 : i64, tpu.core_type = #tpu.core_type<tc>, window_params = [{transform_indices = @transform_0, window_bounds = array<i64: 16, 32>}, {pipeline_mode = #tpu.pipeline_mode<synchronous>, transform_indices = @transform_1, window_bounds = array<i64: 1, 32>}, {pipeline_mode = #tpu.pipeline_mode<synchronous>, transform_indices = @transform_2, window_bounds = array<i64: 1, 32>}, {transform_indices = @transform_3, window_bounds = array<i64: 16, 32>}]} {
    %c0 = arith.constant 0 : index
    %c0_0 = arith.constant 0 : index
    %0 = vector.load %arg1[%c0, %c0_0] : memref<16x32xf32, #tpu.memory_space<vmem>>, vector<16x32xf32>
    %cst = arith.constant dense<0.000000e+00> : vector<16xf32>
    %1 = vector.multi_reduction <add>, %0, %cst [1] : vector<16x32xf32> to vector<16xf32>
    %2 = vector.shape_cast %1 : vector<16xf32> to vector<16x1xf32>
    %cst_1 = arith.constant 3.200000e+01 : f32
    %3 = vector.broadcast %cst_1 : f32 to vector<16x1xf32>
    %4 = arith.divf %2, %3 : vector<16x1xf32>
    %5 = vector.broadcast %4 : vector<16x1xf32> to vector<16x32xf32>
    %6 = arith.subf %0, %5 : vector<16x32xf32>
    %7 = arith.mulf %6, %6 : vector<16x32xf32>
    %cst_2 = arith.constant dense<0.000000e+00> : vector<16xf32>
    %8 = vector.multi_reduction <add>, %7, %cst_2 [1] : vector<16x32xf32> to vector<16xf32>
    %9 = vector.shape_cast %8 : vector<16xf32> to vector<16x1xf32>
    %cst_3 = arith.constant 3.200000e+01 : f32
    %10 = vector.broadcast %cst_3 : f32 to vector<16x1xf32>
    %11 = arith.divf %9, %10 : vector<16x1xf32>
    %12 = vector.broadcast %4 : vector<16x1xf32> to vector<16x32xf32>
    %13 = arith.subf %0, %12 : vector<16x32xf32>
    %cst_4 = arith.constant 9.99999996E-13 : f32
    %14 = vector.broadcast %cst_4 : f32 to vector<16x1xf32>
    %15 = arith.addf %11, %14 : vector<16x1xf32>
    %16 = math.rsqrt %15 : vector<16x1xf32>
    %17 = vector.broadcast %16 : vector<16x1xf32> to vector<16x32xf32>
    %18 = arith.mulf %13, %17 : vector<16x32xf32>
    %c0_5 = arith.constant 0 : index
    %c0_6 = arith.constant 0 : index
    %19 = vector.load %arg2[%c0_5, %c0_6] : memref<1x32xf32, #tpu.memory_space<vmem>>, vector<1x32xf32>
    %20 = vector.broadcast %19 : vector<1x32xf32> to vector<16x32xf32>
    %21 = arith.mulf %18, %20 : vector<16x32xf32>
    %c0_7 = arith.constant 0 : index
    %c0_8 = arith.constant 0 : index
    %22 = vector.load %arg3[%c0_7, %c0_8] : memref<1x32xf32, #tpu.memory_space<vmem>>, vector<1x32xf32>
    %23 = vector.broadcast %22 : vector<1x32xf32> to vector<16x32xf32>
    %24 = arith.addf %21, %23 : vector<16x32xf32>
    %25 = arith.truncf %24 : vector<16x32xf32> to vector<16x32xbf16>
    %c0_9 = arith.constant 0 : index
    %c0_10 = arith.constant 0 : index
    %26 = vector.load %arg4[%c0_9, %c0_10] : memref<16x32xbf16, #tpu.memory_space<vmem>>, vector<16x32xbf16>
    tpu.vector_store %arg4[%c0_9, %c0_10], %25 {strides = array<i32>} : memref<16x32xbf16, #tpu.memory_space<vmem>>, vector<16x32xbf16>,
    return
  }
  func.func @transform_0(%arg0: i32) -> (i32, i32) {
    %c0_i32 = arith.constant 0 : i32
    %c0_i32_0 = arith.constant 0 : i32
    return %arg0, %c0_i32 : i32, i32
  }
  func.func @transform_1(%arg0: i32) -> (i32, i32) {
    %c0_i32 = arith.constant 0 : i32
    %c0_i32_0 = arith.constant 0 : i32
    %c0_i32_1 = arith.constant 0 : i32
    return %c0_i32, %c0_i32_0 : i32, i32
  }
  func.func @transform_2(%arg0: i32) -> (i32, i32) {
    %c0_i32 = arith.constant 0 : i32
    %c0_i32_0 = arith.constant 0 : i32
    %c0_i32_1 = arith.constant 0 : i32
    return %c0_i32, %c0_i32_0 : i32, i32
  }
  func.func @transform_3(%arg0: i32) -> (i32, i32) {
    %c0_i32 = arith.constant 0 : i32
    %c0_i32_0 = arith.constant 0 : i32
    return %arg0, %c0_i32 : i32, i32
  }
}

</mosaic_0001>

<llo_original>
// kernel: tpu_custom_call.1
$region0: #{tpu_custom_call.1}
  #allocation0 [shape = 'u32[]', space=smem, size = 0x4, offset = 0x4, fixed_abs, tag = 'smem constant byte address 0x4 - core index']
  #allocation1 [shape = 'u32[144,128]{1,0:T(1,128)}', space=vmem, size = 0x12000, scoped, tag = 'internal scratch']
  %s0 = inlined_call_operand.hbm [shape: f32[16,32], index: 0, kind: input, shape index: {}]
  %s1 = inlined_call_operand.vmem [shape: f32[1,32], index: 1, kind: input, shape index: {}]
  %s2 = inlined_call_operand.vmem [shape: f32[1,32], index: 2, kind: input, shape index: {}]
  %s3 = inlined_call_operand.hbm [shape: bf16[16,32], index: 3, kind: output, shape index: {}]
  %s4 = sld [smem:[#allocation0]]
  $region26: #{tpu_custom_call.1} parent=0
    _
  %s6 = ssub.s32 1, %s4
  %s7 = scalar_select 0, %s6, %s4
  $region1: #{tpu_custom_call.1} parent=0
    #allocation2 [shape = 'u8[8192]{0}', space=vmem, size = 0x2000, scoped, tag = 'input window, operand 0, single buffered']
    #allocation3 [shape = 's32[1]{0}', space=sflag, size = 0x4, scoped, tag = 'scoped memory for tpu_custom_call.1']
    #allocation4 [shape = 's32[1]{0}', space=sflag, size = 0x4, scoped, tag = 'scoped memory for tpu_custom_call.1']
    #allocation5 [shape = 'u8[4096]{0}', space=vmem, size = 0x1000, scoped, tag = 'output window, operand 0, single buffered']
    %8 = vsyncpa [#allocation3], 0
    %9 = vsyncpa [#allocation4], 0
    // Predicated region
    $region2: #{tpu_custom_call.1} parent=1 // pred_check
      _
    $region3: #{tpu_custom_call.1} parent=1 // pred_check_branch
      %11 = sbr.rel (0) target = $region5
    $region4: #{tpu_custom_call.1} parent=1 // pred_region
      %s13 = ssub.s32 256, 256
      %14 = vsyncadd [#allocation3], %s13
      %s15 = sshll.u32 [#allocation2], 4
      %s16 = int_to_ptr.vmem [resolvable:$true] %s15
      %21 = dma.hbm_to_vmem [thread:$0]  %s0, 256, %s16, [#allocation3], 128, 128, 8
    $region5: #{tpu_custom_call.1} parent=1 // pred_fallthru
      _
    // Predicated region
    $region6: #{tpu_custom_call.1} parent=1 // pred_check
      _
    $region7: #{tpu_custom_call.1} parent=1 // pred_check_branch
      %23 = sbr.rel (0) target = $region9
    $region8: #{tpu_custom_call.1} parent=1 // pred_region
      _
    $region9: #{tpu_custom_call.1} parent=1 // pred_fallthru
      _
    // Predicated region
    $region10: #{tpu_custom_call.1} parent=1 // pred_check
      _
    $region11: #{tpu_custom_call.1} parent=1 // pred_check_branch
      %25 = sbr.rel (0) target = $region13
    $region12: #{tpu_custom_call.1} parent=1 // pred_region
      _
    $region13: #{tpu_custom_call.1} parent=1 // pred_fallthru
      _
    // Predicated region
    $region14: #{tpu_custom_call.1} parent=1 // pred_check
      _
    $region15: #{tpu_custom_call.1} parent=1 // pred_check_branch
      %27 = sbr.rel (0) target = $region17
    $region16: #{tpu_custom_call.1} parent=1 // pred_region
      %28 = dma.done [#allocation3], 256
    $region17: #{tpu_custom_call.1} parent=1 // pred_fallthru
      _
    %v29 = vld [vmem:[#allocation2] sm:$0xff]
    %v30 = vld [vmem:[#allocation2 + $0x8] sm:$0xff]
    %vm31 = vcmask 261120
    %v32 = vsel %vm31, %v29, 0.0
    %33 = vadd.xlane.f32.xlu0 %v32
    %v34 = vpop.xlane.xlu0 %33
    %v35 = vsel %vm31, %v30, 0.0
    %36 = vadd.xlane.f32.xlu0 %v35
    %v37 = vpop.xlane.xlu0 %36
    %v38 = vrcp.pop 32.0
    %v39 = vmul.f32 %v34, %v38
    %v40 = vmul.f32 %v37, %v38
    %v41 = vsub.f32 %v29, %v39
    %v42 = vsub.f32 %v30, %v40
    %v43 = vmul.f32 %v41, %v41
    %v44 = vmul.f32 %v42, %v42
    %v45 = vsel %vm31, %v43, 0.0
    %46 = vadd.xlane.f32.xlu0 %v45
    %v47 = vpop.xlane.xlu0 %46
    %v48 = vsel %vm31, %v44, 0.0
    %49 = vadd.xlane.f32.xlu0 %v48
    %v50 = vpop.xlane.xlu0 %49
    %v51 = vmul.f32 %v47, %v38
    %v52 = vmul.f32 %v50, %v38
    %v53 = vadd.f32 %v51, 1e-12
    %v54 = vadd.f32 %v52, 1e-12
    %v55 = vrsqrt.pop %v53
    %v56 = vrsqrt.pop %v54
    %v57 = vmul.f32 %v41, %v55
    %v58 = vmul.f32 %v42, %v56
    %v59 = vld [vmem:[%s1] sm:$0x1]
    %v61 = vlaneseq
    %v62 = vshrl.u32 %v61, 7
    %v63 = vsub.s32 0, %v62
    %v64 = vrot.slane %v59, %v63
    %v66 = vmul.f32 %v57, %v64
    %v67 = vmul.f32 %v58, %v64
    %v68 = vld [vmem:[%s2] sm:$0x1]
    %v70 = vlaneseq
    %v71 = vshrl.u32 %v70, 7
    %v72 = vsub.s32 0, %v71
    %v73 = vrot.slane %v68, %v72
    %v75 = vadd.f32 %v66, %v73
    %v76 = vadd.f32 %v67, %v73
    %v77 = vpack.c.bf16 %v76, %v75
    %v79 = vunpack.c.l.b16 %v77
    %v80 = vunpack.c.h.b16 %v77
    %v81 = vpack.c.b16 %v79, %v79
    %v82 = vpack.c.b16 %v80, %v80
    %vm85 = vcmask 257024
    %86 = vst.msk [vmem:[#allocation5] sm:$0xf] %vm85, %v81
    %87 = vst.msk [vmem:[#allocation5 + $0x4] sm:$0xf] %vm85, %v82
    // Predicated region
    $region18: #{tpu_custom_call.1} parent=1 // pred_check
      _
    $region19: #{tpu_custom_call.1} parent=1 // pred_check_branch
      %89 = sbr.rel (0) target = $region21
    $region20: #{tpu_custom_call.1} parent=1 // pred_region
      %s91 = ssub.s32 128, 128
      %92 = vsyncadd [#allocation4], %s91
      %s93 = sshll.u32 [#allocation5], 4
      %s94 = int_to_ptr.vmem [resolvable:$true] %s93
      %99 = dma.vmem_to_hbm [thread:$0]  %s94, 128, %s3, [#allocation4], 64, 64, 4
    $region21: #{tpu_custom_call.1} parent=1 // pred_fallthru
      _
    // Predicated region
    $region22: #{tpu_custom_call.1} parent=1 // pred_check
      _
    $region23: #{tpu_custom_call.1} parent=1 // pred_check_branch
      %101 = sbr.rel (0) target = $region25
    $region24: #{tpu_custom_call.1} parent=1 // pred_region
      %102 = dma.done [#allocation4], 128
    $region25: #{tpu_custom_call.1} parent=1 // pred_fallthru
      _
    %103 = vsyncpa [#allocation3], 1
    %104 = vsyncpa [#allocation4], 1

</llo_original>
